<compile_context>
chip_gen: v6e
topology: v6e:2x2x1
jax: 0.10.0
libtpu: 0.0.40
codegen_flags: <defaults>
</compile_context>

<pallas_src>
import jax
import jax.numpy as jnp
from jax.experimental import pallas as pl
from jax.experimental.pallas import tpu as pltpu


def qnetwork_kernel(x_ref, w1_ref, b1_ref, w2_ref, b2_ref, w3_ref, b3_ref, o_ref):
    w_dtype = w1_ref.dtype
    # In-kernel cast of the streamed x tile (no-op for f32 weights); hidden under the DMA pipeline.
    x = x_ref[...].astype(w_dtype)

    # fc1 + relu (MXU accumulates in f32; bias add / ReLU in f32)
    h1 = jnp.dot(x, w1_ref[...], preferred_element_type=jnp.float32) + b1_ref[...]
    h1 = jnp.maximum(h1, 0.0)

    # fc2 + relu (w2: [128, 64], no dead lanes)
    h2 = jnp.dot(h1.astype(w_dtype), w2_ref[...],
                 preferred_element_type=jnp.float32) + b2_ref[...]
    h2 = jnp.maximum(h2, 0.0)

    # fc3 (no activation).  w3/b3 zero-padded only to 8 output lanes.
    y = jnp.dot(h2.astype(w_dtype), w3_ref[...],
                preferred_element_type=jnp.float32) + b3_ref[...]

    o_ref[...] = y.astype(o_ref.dtype)


def init_params(key):
    """Deterministic init mimicking PyTorch nn.Linear default:
    U(-1/sqrt(fan_in), 1/sqrt(fan_in)) for both weight and bias.
    Weights stored as [in, out] (transpose of PyTorch's [out, in]); biases as [1, out]."""
    dims = [(16, 128), (128, 64), (64, 4)]
    params = []
    for i, (fan_in, fan_out) in enumerate(dims):
        kw, kb = jax.random.split(jax.random.fold_in(key, i))
        bound = 1.0 / jnp.sqrt(jnp.float32(fan_in))
        w = jax.random.uniform(kw, (fan_in, fan_out), jnp.float32, -bound, bound)
        b = jax.random.uniform(kb, (fan_out,), jnp.float32, -bound, bound)
        params.extend([w, b.reshape(1, fan_out)])
    return tuple(params)


def prepare_params(params, compute_dtype=jnp.float32):
    """One-time wrapper-side prep:
      * pad ONLY fc3's output dim to 8 lanes (narrow output -> minimal writeback bytes),
      * cast weights to the compute dtype (bf16 halves weight HBM bytes, native MXU),
      * keep biases in f32 (post-MXU elementwise math stays f32)."""
    w1, b1, w2, b2, w3, b3 = params
    OUT_PAD = 8
    w3p = jnp.pad(w3, ((0, 0), (0, OUT_PAD - w3.shape[1])))
    b3p = jnp.pad(b3, ((0, 0), (0, OUT_PAD - b3.shape[1])))
    return (
        w1.astype(compute_dtype), b1.astype(jnp.float32),
        w2.astype(compute_dtype), b2.astype(jnp.float32),
        w3p.astype(compute_dtype), b3p.astype(jnp.float32),
    )


def qnetwork_forward(x, prepared_params, tb=4096, out_dim=4):
    """x: [B, 16] f32 (cast to the weight dtype inside the kernel). Returns [B, out_dim] f32.

    tb: batch tile.  Default 4096 keeps the double-buffered per-step VMEM footprint ~8 MiB
    (safe under v5e's 16 MiB scoped default); raise on v6e, keep num_blocks >= 2 on v7x."""
    w1, b1, w2, b2, w3, b3 = prepared_params
    B, F = x.shape
    n_out_pad = w3.shape[1]  # 8

    # Batch tile: sublane granularity is 8 rows (16 for bf16 activations). Pad B up to a
    # multiple of the tile so every grid step sees a full block.
    row_mult = 16 if w1.dtype == jnp.bfloat16 else 8
    rounded_b = ((B + row_mult - 1) // row_mult) * row_mult
    tb_eff = min(tb, max(row_mult, rounded_b))
    tb_eff = ((tb_eff + row_mult - 1) // row_mult) * row_mult
    num_blocks = pl.cdiv(B, tb_eff)
    b_pad = num_blocks * tb_eff

    x_p = x if b_pad == B else jnp.pad(x, ((0, b_pad - B), (0, 0)))

    # Whole-array VMEM-resident spec: DMA'd once, no per-step double-buffering.
    resident = pl.BlockSpec(memory_space=pltpu.MemorySpace.VMEM)

    out_padded = pl.pallas_call(
        qnetwork_kernel,
        out_shape=jax.ShapeDtypeStruct((b_pad, n_out_pad), jnp.float32),
        grid_spec=pltpu.PrefetchScalarGridSpec(
            num_scalar_prefetch=0,
            grid=(num_blocks,),
            in_specs=[
                pl.BlockSpec((tb_eff, F), lambda i: (i, 0)),   # x: streamed per batch tile
                resident, resident,                            # w1, b1
                resident, resident,                            # w2, b2
                resident, resident,                            # w3, b3
            ],
            out_specs=pl.BlockSpec((tb_eff, n_out_pad), lambda i: (i, 0)),
        ),
        compiler_params=pltpu.CompilerParams(
            dimension_semantics=("parallel",),   # shard batch tiles across TCs (v7x)
        ),
    )(x_p, w1, b1, w2, b2, w3, b3)

    # Un-pad: drop padded batch rows and the 4 padded output lanes.
    return out_padded[:B, :out_dim]


def reference_forward(x, params):
    w1, b1, w2, b2, w3, b3 = params
    h1 = jnp.maximum(x @ w1 + b1, 0.0)
    h2 = jnp.maximum(h1 @ w2 + b2, 0.0)
    return h2 @ w3 + b3


if __name__ == "__main__":
    key = jax.random.PRNGKey(0)
    k_x, k_x2, k_p = jax.random.split(key, 3)

    params = init_params(k_p)

    # --- Test 1: f32 path, small batch, single grid step -> tight tolerance.
    B = 8
    x = jax.random.normal(k_x, (B, 16), jnp.float32)
    ref = reference_forward(x, params)

    out_f32 = qnetwork_forward(x, prepare_params(params, jnp.float32))
    out_f32 = jax.block_until_ready(out_f32)
    assert out_f32.shape == (B, 4), out_f32.shape
    assert jnp.allclose(out_f32, ref, atol=1e-5, rtol=1e-5), "f32 mismatch vs reference"

    # --- Test 2: f32 path with multi-block grid + non-divisible batch (exercises
    # batch padding / tiling logic with a tiny tile).
    B2 = 20
    x2 = jax.random.normal(k_x2, (B2, 16), jnp.float32)
    ref2 = reference_forward(x2, params)
    out2 = qnetwork_forward(x2, prepare_params(params, jnp.float32), tb=8)
    out2 = jax.block_until_ready(out2)
    assert out2.shape == (B2, 4), out2.shape
    assert jnp.allclose(out2, ref2, atol=1e-5, rtol=1e-5), "tiled f32 mismatch vs reference"

    # --- Test 3: bf16 production config (bf16 weights + in-kernel bf16 activations on the
    # MXU, f32 accumulation) -> looser tolerance vs the f32 reference.
    out_bf16 = qnetwork_forward(x, prepare_params(params, jnp.bfloat16))
    out_bf16 = jax.block_until_ready(out_bf16)
    assert out_bf16.shape == (B, 4), out_bf16.shape
    assert jnp.allclose(out_bf16, ref, atol=5e-2, rtol=5e-2), "bf16 mismatch vs reference"

    print("KERNEL_OK")
</pallas_src>

<mosaic_0001>
module attributes {stable_mosaic.version = 11 : i64} {
  func.func @qnetwork_kernel(%arg0: i32, %arg1: memref<8x16xf32, #tpu.memory_space<vmem>>, %arg2: memref<16x128xf32, #tpu.memory_space<vmem>>, %arg3: memref<1x128xf32, #tpu.memory_space<vmem>>, %arg4: memref<128x64xf32, #tpu.memory_space<vmem>>, %arg5: memref<1x64xf32, #tpu.memory_space<vmem>>, %arg6: memref<64x8xf32, #tpu.memory_space<vmem>>, %arg7: memref<1x8xf32, #tpu.memory_space<vmem>>, %arg8: memref<8x8xf32, #tpu.memory_space<vmem>>) attributes {dimension_semantics = [#tpu.dimension_semantics<parallel>], iteration_bounds = array<i64: 1>, scalar_prefetch = 0 : i64, scratch_operands = 0 : i64, tpu.core_type = #tpu.core_type<tc>, window_params = [{transform_indices = @transform_0, window_bounds = array<i64: 8, 16>}, {pipeline_mode = #tpu.pipeline_mode<synchronous>, transform_indices = @transform_1, window_bounds = array<i64: 16, 128>}, {pipeline_mode = #tpu.pipeline_mode<synchronous>, transform_indices = @transform_2, window_bounds = array<i64: 1, 128>}, {pipeline_mode = #tpu.pipeline_mode<synchronous>, transform_indices = @transform_3, window_bounds = array<i64: 128, 64>}, {pipeline_mode = #tpu.pipeline_mode<synchronous>, transform_indices = @transform_4, window_bounds = array<i64: 1, 64>}, {pipeline_mode = #tpu.pipeline_mode<synchronous>, transform_indices = @transform_5, window_bounds = array<i64: 64, 8>}, {pipeline_mode = #tpu.pipeline_mode<synchronous>, transform_indices = @transform_6, window_bounds = array<i64: 1, 8>}, {transform_indices = @transform_7, window_bounds = array<i64: 8, 8>}]} {
    %c0 = arith.constant 0 : index
    %c0_0 = arith.constant 0 : index
    %0 = vector.load %arg1[%c0, %c0_0] : memref<8x16xf32, #tpu.memory_space<vmem>>, vector<8x16xf32>
    %c0_1 = arith.constant 0 : index
    %c0_2 = arith.constant 0 : index
    %1 = vector.load %arg2[%c0_1, %c0_2] : memref<16x128xf32, #tpu.memory_space<vmem>>, vector<16x128xf32>
    %cst = arith.constant dense<0.000000e+00> : vector<8x128xf32>
    %2 = tpu.matmul %0, %1, %cst {dimension_numbers = #tpu.dot_dimension_numbers<[1], [0], [0], [1], [0, 0, 1, 1], [], []>} : vector<8x16xf32>, vector<16x128xf32>, vector<8x128xf32> -> vector<8x128xf32>
    %c0_3 = arith.constant 0 : index
    %c0_4 = arith.constant 0 : index
    %3 = vector.load %arg3[%c0_3, %c0_4] : memref<1x128xf32, #tpu.memory_space<vmem>>, vector<1x128xf32>
    %4 = vector.broadcast %3 : vector<1x128xf32> to vector<8x128xf32>
    %5 = arith.addf %2, %4 : vector<8x128xf32>
    %cst_5 = arith.constant 0.000000e+00 : f32
    %6 = vector.broadcast %cst_5 : f32 to vector<8x128xf32>
    %7 = arith.maximumf %5, %6 : vector<8x128xf32>
    %c0_6 = arith.constant 0 : index
    %c0_7 = arith.constant 0 : index
    %8 = vector.load %arg4[%c0_6, %c0_7] : memref<128x64xf32, #tpu.memory_space<vmem>>, vector<128x64xf32>
    %cst_8 = arith.constant dense<0.000000e+00> : vector<8x64xf32>
    %9 = tpu.matmul %7, %8, %cst_8 {dimension_numbers = #tpu.dot_dimension_numbers<[1], [0], [0], [1], [0, 0, 1, 1], [], []>} : vector<8x128xf32>, vector<128x64xf32>, vector<8x64xf32> -> vector<8x64xf32>
    %c0_9 = arith.constant 0 : index
    %c0_10 = arith.constant 0 : index
    %10 = vector.load %arg5[%c0_9, %c0_10] : memref<1x64xf32, #tpu.memory_space<vmem>>, vector<1x64xf32>
    %11 = vector.broadcast %10 : vector<1x64xf32> to vector<8x64xf32>
    %12 = arith.addf %9, %11 : vector<8x64xf32>
    %cst_11 = arith.constant 0.000000e+00 : f32
    %13 = vector.broadcast %cst_11 : f32 to vector<8x64xf32>
    %14 = arith.maximumf %12, %13 : vector<8x64xf32>
    %c0_12 = arith.constant 0 : index
    %c0_13 = arith.constant 0 : index
    %15 = vector.load %arg6[%c0_12, %c0_13] : memref<64x8xf32, #tpu.memory_space<vmem>>, vector<64x8xf32>
    %cst_14 = arith.constant dense<0.000000e+00> : vector<8x8xf32>
    %16 = tpu.matmul %14, %15, %cst_14 {dimension_numbers = #tpu.dot_dimension_numbers<[1], [0], [0], [1], [0, 0, 1, 1], [], []>} : vector<8x64xf32>, vector<64x8xf32>, vector<8x8xf32> -> vector<8x8xf32>
    %c0_15 = arith.constant 0 : index
    %c0_16 = arith.constant 0 : index
    %17 = vector.load %arg7[%c0_15, %c0_16] : memref<1x8xf32, #tpu.memory_space<vmem>>, vector<1x8xf32>
    %18 = vector.broadcast %17 : vector<1x8xf32> to vector<8x8xf32>
    %19 = arith.addf %16, %18 : vector<8x8xf32>
    %c0_17 = arith.constant 0 : index
    %c0_18 = arith.constant 0 : index
    %20 = vector.load %arg8[%c0_17, %c0_18] : memref<8x8xf32, #tpu.memory_space<vmem>>, vector<8x8xf32>
    tpu.vector_store %arg8[%c0_17, %c0_18], %19 {strides = array<i32>} : memref<8x8xf32, #tpu.memory_space<vmem>>, vector<8x8xf32>,
    return
  }
  func.func @transform_0(%arg0: i32) -> (i32, i32) {
    %c0_i32 = arith.constant 0 : i32
    %c0_i32_0 = arith.constant 0 : i32
    return %arg0, %c0_i32 : i32, i32
  }
  func.func @transform_1(%arg0: i32) -> (i32, i32) {
    %c0_i32 = arith.constant 0 : i32
    %c0_i32_0 = arith.constant 0 : i32
    %c0_i32_1 = arith.constant 0 : i32
    return %c0_i32, %c0_i32_0 : i32, i32
  }
  func.func @transform_2(%arg0: i32) -> (i32, i32) {
    %c0_i32 = arith.constant 0 : i32
    %c0_i32_0 = arith.constant 0 : i32
    %c0_i32_1 = arith.constant 0 : i32
    return %c0_i32, %c0_i32_0 : i32, i32
  }
  func.func @transform_3(%arg0: i32) -> (i32, i32) {
    %c0_i32 = arith.constant 0 : i32
    %c0_i32_0 = arith.constant 0 : i32
    %c0_i32_1 = arith.constant 0 : i32
    return %c0_i32, %c0_i32_0 : i32, i32
  }
  func.func @transform_4(%arg0: i32) -> (i32, i32) {
    %c0_i32 = arith.constant 0 : i32
    %c0_i32_0 = arith.constant 0 : i32
    %c0_i32_1 = arith.constant 0 : i32
    return %c0_i32, %c0_i32_0 : i32, i32
  }
  func.func @transform_5(%arg0: i32) -> (i32, i32) {
    %c0_i32 = arith.constant 0 : i32
    %c0_i32_0 = arith.constant 0 : i32
    %c0_i32_1 = arith.constant 0 : i32
    return %c0_i32, %c0_i32_0 : i32, i32
  }
  func.func @transform_6(%arg0: i32) -> (i32, i32) {
    %c0_i32 = arith.constant 0 : i32
    %c0_i32_0 = arith.constant 0 : i32
    %c0_i32_1 = arith.constant 0 : i32
    return %c0_i32, %c0_i32_0 : i32, i32
  }
  func.func @transform_7(%arg0: i32) -> (i32, i32) {
    %c0_i32 = arith.constant 0 : i32
    %c0_i32_0 = arith.constant 0 : i32
    return %arg0, %c0_i32 : i32, i32
  }
}

</mosaic_0001>

<llo_original>
// kernel: tpu_custom_call.1
$region0: #{tpu_custom_call.1}
  #allocation0 [shape = 'u32[]', space=smem, size = 0x4, offset = 0x4, fixed_abs, tag = 'smem constant byte address 0x4 - core index']
  #allocation1 [shape = 'u32[144,128]{1,0:T(1,128)}', space=vmem, size = 0x12000, scoped, tag = 'internal scratch']
  %s0 = inlined_call_operand.vmem [shape: f32[8,16], index: 0, kind: input, shape index: {}]
  %s1 = inlined_call_operand.vmem [shape: f32[16,128], index: 1, kind: input, shape index: {}]
  %s2 = inlined_call_operand.vmem [shape: f32[1,128], index: 2, kind: input, shape index: {}]
  %s3 = inlined_call_operand.vmem [shape: f32[128,64], index: 3, kind: input, shape index: {}]
  %s4 = inlined_call_operand.vmem [shape: f32[1,64], index: 4, kind: input, shape index: {}]
  %s5 = inlined_call_operand.vmem [shape: f32[64,8], index: 5, kind: input, shape index: {}]
  %s6 = inlined_call_operand.vmem [shape: f32[1,8], index: 6, kind: input, shape index: {}]
  %s7 = inlined_call_operand.hbm [shape: f32[8,8], index: 7, kind: output, shape index: {}]
  %s8 = sld [smem:[#allocation0]]
  $region38: #{tpu_custom_call.1} parent=0
    _
  %s10 = ssub.s32 1, %s8
  %s11 = scalar_select 0, %s10, %s8
  $region1: #{tpu_custom_call.1} parent=0
    #allocation2 [shape = 'u8[4096]{0}', space=vmem, size = 0x1000, scoped, tag = 'output window, operand 0, single buffered']
    #allocation3 [shape = 's32[1]{0}', space=sflag, size = 0x4, scoped, tag = 'scoped memory for tpu_custom_call.1']
    %12 = vsyncpa [#allocation3], 0
    // Predicated region
    $region2: #{tpu_custom_call.1} parent=1 // pred_check
      _
    $region3: #{tpu_custom_call.1} parent=1 // pred_check_branch
      %14 = sbr.rel (0) target = $region5
    $region4: #{tpu_custom_call.1} parent=1 // pred_region
      _
    $region5: #{tpu_custom_call.1} parent=1 // pred_fallthru
      _
    // Predicated region
    $region6: #{tpu_custom_call.1} parent=1 // pred_check
      _
    $region7: #{tpu_custom_call.1} parent=1 // pred_check_branch
      %16 = sbr.rel (0) target = $region9
    $region8: #{tpu_custom_call.1} parent=1 // pred_region
      _
    $region9: #{tpu_custom_call.1} parent=1 // pred_fallthru
      _
    // Predicated region
    $region10: #{tpu_custom_call.1} parent=1 // pred_check
      _
    $region11: #{tpu_custom_call.1} parent=1 // pred_check_branch
      %18 = sbr.rel (0) target = $region13
    $region12: #{tpu_custom_call.1} parent=1 // pred_region
      _
    $region13: #{tpu_custom_call.1} parent=1 // pred_fallthru
      _
    // Predicated region
    $region14: #{tpu_custom_call.1} parent=1 // pred_check
      _
    $region15: #{tpu_custom_call.1} parent=1 // pred_check_branch
      %20 = sbr.rel (0) target = $region17
    $region16: #{tpu_custom_call.1} parent=1 // pred_region
      _
    $region17: #{tpu_custom_call.1} parent=1 // pred_fallthru
      _
    // Predicated region
    $region18: #{tpu_custom_call.1} parent=1 // pred_check
      _
    $region19: #{tpu_custom_call.1} parent=1 // pred_check_branch
      %22 = sbr.rel (0) target = $region21
    $region20: #{tpu_custom_call.1} parent=1 // pred_region
      _
    $region21: #{tpu_custom_call.1} parent=1 // pred_fallthru
      _
    // Predicated region
    $region22: #{tpu_custom_call.1} parent=1 // pred_check
      _
    $region23: #{tpu_custom_call.1} parent=1 // pred_check_branch
      %24 = sbr.rel (0) target = $region25
    $region24: #{tpu_custom_call.1} parent=1 // pred_region
      _
    $region25: #{tpu_custom_call.1} parent=1 // pred_fallthru
      _
    // Predicated region
    $region26: #{tpu_custom_call.1} parent=1 // pred_check
      _
    $region27: #{tpu_custom_call.1} parent=1 // pred_check_branch
      %26 = sbr.rel (0) target = $region29
    $region28: #{tpu_custom_call.1} parent=1 // pred_region
      _
    $region29: #{tpu_custom_call.1} parent=1 // pred_fallthru
      _
    %v27 = vld [vmem:[%s0] sm:$0xff]
    %v28 = vld [vmem:[%s1] sm:$0xff]
    %v29 = vld [vmem:[%s1 + $0x8] sm:$0xff]
    %v30 = vld [vmem:[%s2] sm:$0x1]
    %v32 = vlaneseq
    %v33 = vshrl.u32 %v32, 7
    %v34 = vsub.s32 0, %v33
    %v35 = vrot.slane %v30, %v34
    %vm37 = vcmask 130048
    %v39 = vsel %vm37, %v27, 0
    %41 = vmatprep.subr.mxu0 0.0
    %42 = vmatpush1.msra.mxu0 0.0
    %43 = vmatprep.subr.mxu0 0.0
    %44 = vmatpush1.msra.mxu0 0.0
    %45 = vmatprep.subr.mxu0 0.0
    %46 = vmatpush1.msra.mxu0 0.0
    %47 = vmatprep.subr.mxu0 0.0
    %48 = vmatpush1.msra.mxu0 0.0
    %49 = vmatprep.subr.mxu0 0.0
    %50 = vmatpush1.msra.mxu0 0.0
    %51 = vmatprep.subr.mxu0 0.0
    %52 = vmatpush1.msra.mxu0 0.0
    %53 = vmatprep.subr.mxu0 0.0
    %54 = vmatpush1.msra.mxu0 0.0
    %55 = vmatprep.subr.mxu0 0.0
    %56 = vmatpush1.msra.mxu0 0.0
    %57 = vmatprep.subr.mxu0 0.0
    %58 = vmatpush1.msra.mxu0 0.0
    %59 = vmatprep.subr.mxu0 0.0
    %60 = vmatpush1.msra.mxu0 0.0
    %61 = vmatprep.subr.mxu0 0.0
    %62 = vmatpush1.msra.mxu0 0.0
    %63 = vmatprep.subr.mxu0 0.0
    %64 = vmatpush1.msra.mxu0 0.0
    %65 = vmatprep.subr.mxu0 0.0
    %66 = vmatpush1.msra.mxu0 0.0
    %67 = vmatprep.subr.mxu0 0.0
    %68 = vmatpush1.msra.mxu0 0.0
    %69 = vmatprep.subr.mxu0 0.0
    %70 = vmatpush1.msra.mxu0 %v29
    %71 = vmatprep.subr.mxu0 0.0
    %72 = vmatpush1.msra.mxu0 %v28
    %73 = vmatprep.subr.mxu0 0.0
    %74 = vmatpush2.msra.mxu0 0.0
    %75 = vmatprep.subr.mxu0 0.0
    %76 = vmatpush2.msra.mxu0 0.0
    %77 = vmatprep.subr.mxu0 0.0
    %78 = vmatpush2.msra.mxu0 0.0
    %79 = vmatprep.subr.mxu0 0.0
    %80 = vmatpush2.msra.mxu0 0.0
    %81 = vmatprep.subr.mxu0 0.0
    %82 = vmatpush2.msra.mxu0 0.0
    %83 = vmatprep.subr.mxu0 0.0
    %84 = vmatpush2.msra.mxu0 0.0
    %85 = vmatprep.subr.mxu0 0.0
    %86 = vmatpush2.msra.mxu0 0.0
    %87 = vmatprep.subr.mxu0 0.0
    %88 = vmatpush2.msra.mxu0 0.0
    %89 = vmatprep.subr.mxu0 0.0
    %90 = vmatpush2.msra.mxu0 0.0
    %91 = vmatprep.subr.mxu0 0.0
    %92 = vmatpush2.msra.mxu0 0.0
    %93 = vmatprep.subr.mxu0 0.0
    %94 = vmatpush2.msra.mxu0 0.0
    %95 = vmatprep.subr.mxu0 0.0
    %96 = vmatpush2.msra.mxu0 0.0
    %97 = vmatprep.subr.mxu0 0.0
    %98 = vmatpush2.msra.mxu0 0.0
    %99 = vmatprep.subr.mxu0 0.0
    %100 = vmatpush2.msra.mxu0 0.0
    %101 = vmatprep.subr.mxu0 0.0
    %102 = vmatpush2.msra.mxu0 0.0
    %103 = vmatprep.subr.mxu0 0.0
    %104 = vmatpush2.msra.mxu0 0.0
    %105 = vmatprep.mubr.f32.mxu0 0.0
    %106 = vmatmul.mubr.f32.gmra.mxu0 %v39
    %v107 = vpop.f32.mrf.mxu0
    %v108 = vadd.f32 %v35, %v107
    %v109 = vpop.f32.mrf.mxu0
    %110 = vdwg.mxu0
    %v111 = vmax.f32 %v108, 0.0
    %v112 = vld [vmem:[%s3] sm:$0xff]
    %v113 = vld [vmem:[%s3 + $0x8] sm:$0xff]
    %v114 = vld [vmem:[%s3 + $0x10] sm:$0xff]
    %v115 = vld [vmem:[%s3 + $0x18] sm:$0xff]
    %v116 = vld [vmem:[%s3 + $0x20] sm:$0xff]
    %v117 = vld [vmem:[%s3 + $0x28] sm:$0xff]
    %v118 = vld [vmem:[%s3 + $0x30] sm:$0xff]
    %v119 = vld [vmem:[%s3 + $0x38] sm:$0xff]
    %v120 = vld [vmem:[%s3 + $0x40] sm:$0xff]
    %v121 = vld [vmem:[%s3 + $0x48] sm:$0xff]
    %v122 = vld [vmem:[%s3 + $0x50] sm:$0xff]
    %v123 = vld [vmem:[%s3 + $0x58] sm:$0xff]
    %v124 = vld [vmem:[%s3 + $0x60] sm:$0xff]
    %v125 = vld [vmem:[%s3 + $0x68] sm:$0xff]
    %v126 = vld [vmem:[%s3 + $0x70] sm:$0xff]
    %v127 = vld [vmem:[%s3 + $0x78] sm:$0xff]
    %v128 = vld [vmem:[%s4] sm:$0x1]
    %v130 = vlaneseq
    %v131 = vshrl.u32 %v130, 7
    %v132 = vsub.s32 0, %v131
    %v133 = vrot.slane %v128, %v132
    %135 = vmatprep.subr.mxu0 0.0
    %136 = vmatpush1.msra.mxu0 %v127
    %137 = vmatprep.subr.mxu0 0.0
    %138 = vmatpush1.msra.mxu0 %v126
    %139 = vmatprep.subr.mxu0 0.0
    %140 = vmatpush1.msra.mxu0 %v125
    %141 = vmatprep.subr.mxu0 0.0
    %142 = vmatpush1.msra.mxu0 %v124
    %143 = vmatprep.subr.mxu0 0.0
    %144 = vmatpush1.msra.mxu0 %v123
    %145 = vmatprep.subr.mxu0 0.0
    %146 = vmatpush1.msra.mxu0 %v122
    %147 = vmatprep.subr.mxu0 0.0
    %148 = vmatpush1.msra.mxu0 %v121
    %149 = vmatprep.subr.mxu0 0.0
    %150 = vmatpush1.msra.mxu0 %v120
    %151 = vmatprep.subr.mxu0 0.0
    %152 = vmatpush1.msra.mxu0 %v119
    %153 = vmatprep.subr.mxu0 0.0
    %154 = vmatpush1.msra.mxu0 %v118
    %155 = vmatprep.subr.mxu0 0.0
    %156 = vmatpush1.msra.mxu0 %v117
    %157 = vmatprep.subr.mxu0 0.0
    %158 = vmatpush1.msra.mxu0 %v116
    %159 = vmatprep.subr.mxu0 0.0
    %160 = vmatpush1.msra.mxu0 %v115
    %161 = vmatprep.subr.mxu0 0.0
    %162 = vmatpush1.msra.mxu0 %v114
    %163 = vmatprep.subr.mxu0 0.0
    %164 = vmatpush1.msra.mxu0 %v113
    %165 = vmatprep.subr.mxu0 0.0
    %166 = vmatpush1.msra.mxu0 %v112
    %167 = vmatprep.subr.mxu0 0.0
    %168 = vmatpush2.msra.mxu0 0.0
    %169 = vmatprep.subr.mxu0 0.0
    %170 = vmatpush2.msra.mxu0 0.0
    %171 = vmatprep.subr.mxu0 0.0
    %172 = vmatpush2.msra.mxu0 0.0
    %173 = vmatprep.subr.mxu0 0.0
    %174 = vmatpush2.msra.mxu0 0.0
    %175 = vmatprep.subr.mxu0 0.0
    %176 = vmatpush2.msra.mxu0 0.0
    %177 = vmatprep.subr.mxu0 0.0
    %178 = vmatpush2.msra.mxu0 0.0
    %179 = vmatprep.subr.mxu0 0.0
    %180 = vmatpush2.msra.mxu0 0.0
    %181 = vmatprep.subr.mxu0 0.0
    %182 = vmatpush2.msra.mxu0 0.0
    %183 = vmatprep.subr.mxu0 0.0
    %184 = vmatpush2.msra.mxu0 0.0
    %185 = vmatprep.subr.mxu0 0.0
    %186 = vmatpush2.msra.mxu0 0.0
    %187 = vmatprep.subr.mxu0 0.0
    %188 = vmatpush2.msra.mxu0 0.0
    %189 = vmatprep.subr.mxu0 0.0
    %190 = vmatpush2.msra.mxu0 0.0
    %191 = vmatprep.subr.mxu0 0.0
    %192 = vmatpush2.msra.mxu0 0.0
    %193 = vmatprep.subr.mxu0 0.0
    %194 = vmatpush2.msra.mxu0 0.0
    %195 = vmatprep.subr.mxu0 0.0
    %196 = vmatpush2.msra.mxu0 0.0
    %197 = vmatprep.subr.mxu0 0.0
    %198 = vmatpush2.msra.mxu0 0.0
    %199 = vmatprep.mubr.f32.mxu0 0.0
    %200 = vmatmul.mubr.f32.gmra.mxu0 %v111
    %v201 = vpop.f32.mrf.mxu0
    %v202 = vadd.f32 %v133, %v201
    %v203 = vpop.f32.mrf.mxu0
    %204 = vdwg.mxu0
    %v205 = vmax.f32 %v202, 0.0
    %v206 = vld [vmem:[%s5] sm:$0xff]
    %v207 = vld [vmem:[%s5 + $0x8] sm:$0xff]
    %v208 = vld [vmem:[%s5 + $0x10] sm:$0xff]
    %v209 = vld [vmem:[%s5 + $0x18] sm:$0xff]
    %v210 = vld [vmem:[%s5 + $0x20] sm:$0xff]
    %v211 = vld [vmem:[%s5 + $0x28] sm:$0xff]
    %v212 = vld [vmem:[%s5 + $0x30] sm:$0xff]
    %v213 = vld [vmem:[%s5 + $0x38] sm:$0xff]
    %v214 = vld [vmem:[%s6] sm:$0x1]
    %v216 = vlaneseq
    %v217 = vshrl.u32 %v216, 7
    %v218 = vsub.s32 0, %v217
    %v219 = vrot.slane %v214, %v218
    %vm221 = vcmask 523264
    %v223 = vsel %vm221, %v205, 0
    %225 = vmatprep.subr.mxu0 0.0
    %226 = vmatpush1.msra.mxu0 0.0
    %227 = vmatprep.subr.mxu0 0.0
    %228 = vmatpush1.msra.mxu0 0.0
    %229 = vmatprep.subr.mxu0 0.0
    %230 = vmatpush1.msra.mxu0 0.0
    %231 = vmatprep.subr.mxu0 0.0
    %232 = vmatpush1.msra.mxu0 0.0
    %233 = vmatprep.subr.mxu0 0.0
    %234 = vmatpush1.msra.mxu0 0.0
    %235 = vmatprep.subr.mxu0 0.0
    %236 = vmatpush1.msra.mxu0 0.0
    %237 = vmatprep.subr.mxu0 0.0
    %238 = vmatpush1.msra.mxu0 0.0
    %239 = vmatprep.subr.mxu0 0.0
    %240 = vmatpush1.msra.mxu0 0.0
    %241 = vmatprep.subr.mxu0 0.0
    %242 = vmatpush1.msra.mxu0 %v213
    %243 = vmatprep.subr.mxu0 0.0
    %244 = vmatpush1.msra.mxu0 %v212
    %245 = vmatprep.subr.mxu0 0.0
    %246 = vmatpush1.msra.mxu0 %v211
    %247 = vmatprep.subr.mxu0 0.0
    %248 = vmatpush1.msra.mxu0 %v210
    %249 = vmatprep.subr.mxu0 0.0
    %250 = vmatpush1.msra.mxu0 %v209
    %251 = vmatprep.subr.mxu0 0.0
    %252 = vmatpush1.msra.mxu0 %v208
    %253 = vmatprep.subr.mxu0 0.0
    %254 = vmatpush1.msra.mxu0 %v207
    %255 = vmatprep.subr.mxu0 0.0
    %256 = vmatpush1.msra.mxu0 %v206
    %257 = vmatprep.subr.mxu0 0.0
    %258 = vmatpush2.msra.mxu0 0.0
    %259 = vmatprep.subr.mxu0 0.0
    %260 = vmatpush2.msra.mxu0 0.0
    %261 = vmatprep.subr.mxu0 0.0
    %262 = vmatpush2.msra.mxu0 0.0
    %263 = vmatprep.subr.mxu0 0.0
    %264 = vmatpush2.msra.mxu0 0.0
    %265 = vmatprep.subr.mxu0 0.0
    %266 = vmatpush2.msra.mxu0 0.0
    %267 = vmatprep.subr.mxu0 0.0
    %268 = vmatpush2.msra.mxu0 0.0
    %269 = vmatprep.subr.mxu0 0.0
    %270 = vmatpush2.msra.mxu0 0.0
    %271 = vmatprep.subr.mxu0 0.0
    %272 = vmatpush2.msra.mxu0 0.0
    %273 = vmatprep.subr.mxu0 0.0
    %274 = vmatpush2.msra.mxu0 0.0
    %275 = vmatprep.subr.mxu0 0.0
    %276 = vmatpush2.msra.mxu0 0.0
    %277 = vmatprep.subr.mxu0 0.0
    %278 = vmatpush2.msra.mxu0 0.0
    %279 = vmatprep.subr.mxu0 0.0
    %280 = vmatpush2.msra.mxu0 0.0
    %281 = vmatprep.subr.mxu0 0.0
    %282 = vmatpush2.msra.mxu0 0.0
    %283 = vmatprep.subr.mxu0 0.0
    %284 = vmatpush2.msra.mxu0 0.0
    %285 = vmatprep.subr.mxu0 0.0
    %286 = vmatpush2.msra.mxu0 0.0
    %287 = vmatprep.subr.mxu0 0.0
    %288 = vmatpush2.msra.mxu0 0.0
    %289 = vmatprep.mubr.f32.mxu0 0.0
    %290 = vmatmul.mubr.f32.gmra.mxu0 %v223
    %v291 = vpop.f32.mrf.mxu0
    %v292 = vadd.f32 %v219, %v291
    %v293 = vpop.f32.mrf.mxu0
    %294 = vdwg.mxu0
    %vm295 = vcmask 64512
    %296 = vst.msk [vmem:[#allocation2] sm:$0xff] %vm295, %v292
    // Predicated region
    $region30: #{tpu_custom_call.1} parent=1 // pred_check
      _
    $region31: #{tpu_custom_call.1} parent=1 // pred_check_branch
      %298 = sbr.rel (0) target = $region33
    $region32: #{tpu_custom_call.1} parent=1 // pred_region
      %s300 = ssub.s32 128, 128
      %301 = vsyncadd [#allocation3], %s300
      %s303 = sshll.u32 [#allocation2], 4
      %s304 = int_to_ptr.vmem [resolvable:$true] %s303
      %306 = dma.vmem_to_hbm [thread:$0]  %s304, 128, %s7, [#allocation3]
    $region33: #{tpu_custom_call.1} parent=1 // pred_fallthru
      _
    // Predicated region
    $region34: #{tpu_custom_call.1} parent=1 // pred_check
      _
    $region35: #{tpu_custom_call.1} parent=1 // pred_check_branch
      %308 = sbr.rel (0) target = $region37
    $region36: #{tpu_custom_call.1} parent=1 // pred_region
      %309 = dma.done [#allocation3], 128
    $region37: #{tpu_custom_call.1} parent=1 // pred_fallthru
      _
    %310 = vsyncpa [#allocation3], 1

</llo_original>
